<compile_context>
chip_gen: v6e
topology: v6e:2x2x1
jax: 0.10.0
libtpu: 0.0.40
codegen_flags: <defaults>
</compile_context>

<pallas_src>
import functools
import math

import jax
import jax.numpy as jnp
from jax import lax
from jax.experimental import pallas as pl
from jax.experimental.pallas import tpu as pltpu


# --------------------------------------------------------------------------
# Helpers
# --------------------------------------------------------------------------

def _vmem_limit_bytes():
    """Generation-aware scoped-VMEM ceiling (<=100 MiB v5e/v6e, ~54 MiB v7x)."""
    try:
        cap = pltpu.get_tpu_info().vmem_capacity_bytes
    except Exception:
        cap = 64 * 1024 * 1024  # conservative (v7x physical)
    return int(min(cap * 0.85, 100 * 1024 * 1024))


def _resident_spec(shape):
    """Constant-index BlockSpec: DMA'd once, resident for the whole grid.
    Single-buffered (pl.Buffered(1)) since the block index never changes."""
    def _const(*_):
        return (0,) * len(shape)
    try:
        return pl.BlockSpec(shape, _const, pipeline_mode=pl.Buffered(1))
    except TypeError:  # older jax without pipeline_mode kwarg
        return pl.BlockSpec(shape, _const)


def _choose_block(size, candidates, small_cap):
    """Pick a tile size for `size`; returns (block, padded_size)."""
    if size <= small_cap:
        return size, size
    for c in candidates:
        if size % c == 0:
            return c, size
    c = candidates[-1]
    return c, ((size + c - 1) // c) * c  # pad up; caller slices back


def _choose_block_k(sk):
    """Key/value tile for the flash path (must divide Sk; no key masking)."""
    if sk <= 1024:
        return sk
    for c in (1024, 512, 256, 128):
        if sk % c == 0:
            return c
    # TODO(synk): non-128-aligned large Sk falls back to a single full-Sk tile
    # (padding Sk would require masking padded keys in the online softmax).
    return sk


# --------------------------------------------------------------------------
# Kernels
# --------------------------------------------------------------------------

def _kv_proj_kernel(k_ref, v_ref, wk_ref, bk_ref, wv_ref, bv_ref, ko_ref, vo_ref):
    """K/V linear projections (x @ W + b), run once over all (B*Sk) rows."""
    ko_ref[...] = (jnp.dot(k_ref[...], wk_ref[...],
                           preferred_element_type=jnp.float32)
                   + bk_ref[...]).astype(ko_ref.dtype)
    vo_ref[...] = (jnp.dot(v_ref[...], wv_ref[...],
                           preferred_element_type=jnp.float32)
                   + bv_ref[...]).astype(vo_ref.dtype)


def _flash_mha_kernel(q_ref, k_ref, v_ref, wq_ref, bq_ref, wo_ref, bo_ref,
                      out_ref, q_scr, m_scr, l_scr, acc_scr,
                      *, n_heads, head_dim, compute_dtype):
    """Output-only path: online softmax over Sk tiles (grid axis 2, arbitrary)."""
    ki = pl.program_id(2)

    @pl.when(ki == 0)
    def _init():
        # Project this query tile once; 1/sqrt(d) is pre-folded into wq/bq.
        qp = (jnp.dot(q_ref[0], wq_ref[...],
                      preferred_element_type=jnp.float32) + bq_ref[...])
        q_scr[...] = qp.astype(compute_dtype)
        m_scr[...] = jnp.full(m_scr.shape, -jnp.inf, dtype=m_scr.dtype)
        l_scr[...] = jnp.zeros_like(l_scr)
        acc_scr[...] = jnp.zeros_like(acc_scr)

    k = k_ref[0]                       # (block_k, H), pre-projected
    v = v_ref[0]                       # (block_k, H), pre-projected

    for h in range(n_heads):           # static unroll over heads
        lo = h * head_dim
        hi = lo + head_dim
        q_h = q_scr[:, lo:hi]          # (tq, d)
        k_h = k[:, lo:hi]              # (tk, d)
        v_h = v[:, lo:hi]              # (tk, d)

        # QK^T without materializing a transposed copy: contract last dims.
        energy = lax.dot_general(q_h, k_h, (((1,), (1,)), ((), ())),
                                 preferred_element_type=jnp.float32)  # (tq, tk)

        # TODO(synk): `mask` (masked_fill) and dropout(attention) not implemented.
        m_prev = m_scr[:, h:h + 1]                                    # (tq, 1)
        m_new = jnp.maximum(m_prev, jnp.max(energy, axis=-1, keepdims=True))
        alpha = jnp.exp(m_prev - m_new)
        p = jnp.exp(energy - m_new)                                   # f32
        l_scr[:, h:h + 1] = alpha * l_scr[:, h:h + 1] + jnp.sum(
            p, axis=-1, keepdims=True)
        acc_scr[:, lo:hi] = alpha * acc_scr[:, lo:hi] + jnp.dot(
            p.astype(compute_dtype), v_h, preferred_element_type=jnp.float32)
        m_scr[:, h:h + 1] = m_new

    @pl.when(ki == pl.num_programs(2) - 1)
    def _finalize():
        for h in range(n_heads):
            lo = h * head_dim
            hi = lo + head_dim
            inv = pl.reciprocal(l_scr[:, h:h + 1], approx=True)   # EUP slot
            acc_scr[:, lo:hi] = acc_scr[:, lo:hi] * inv
        x = acc_scr[...].astype(compute_dtype)                    # (tq, H)
        out = (jnp.dot(x, wo_ref[...], preferred_element_type=jnp.float32)
               + bo_ref[...])
        out_ref[0] = out.astype(out_ref.dtype)


def _mha_attn_kernel(q_ref, k_ref, v_ref, wq_ref, bq_ref, wo_ref, bo_ref,
                     out_ref, attn_ref, x_scr,
                     *, n_heads, head_dim, compute_dtype, approx_recip):
    """Attention-returning path: single pass over full Sk per query tile."""
    qp = (jnp.dot(q_ref[0], wq_ref[...], preferred_element_type=jnp.float32)
          + bq_ref[...]).astype(compute_dtype)                    # (tq, H)
    k = k_ref[0]                                                  # (Sk, H)
    v = v_ref[0]                                                  # (Sk, H)

    for h in range(n_heads):
        lo = h * head_dim
        hi = lo + head_dim
        energy = lax.dot_general(qp[:, lo:hi], k[:, lo:hi],
                                 (((1,), (1,)), ((), ())),
                                 preferred_element_type=jnp.float32)  # (tq, Sk)
        # TODO(synk): `mask` (masked_fill) and dropout(attention) not implemented.
        e_max = jnp.max(energy, axis=-1, keepdims=True)
        p = jnp.exp(energy - e_max)
        denom = jnp.sum(p, axis=-1, keepdims=True)
        attn = p * pl.reciprocal(denom, approx=approx_recip)          # f32
        attn_ref[0, h] = attn.astype(attn_ref.dtype)
        # Write PV result into the resident scratch slice (no concatenate).
        x_scr[:, lo:hi] = jnp.dot(attn.astype(compute_dtype), v[:, lo:hi],
                                  preferred_element_type=jnp.float32)

    out = (jnp.dot(x_scr[...].astype(compute_dtype), wo_ref[...],
                   preferred_element_type=jnp.float32) + bo_ref[...])
    out_ref[0] = out.astype(out_ref.dtype)


# --------------------------------------------------------------------------
# Wrappers
# --------------------------------------------------------------------------

def prepare_params(params, n_heads, compute_dtype=jnp.bfloat16):
    """One-time weight prep: fold 1/sqrt(d) into the query projection and cast
    matmul weights to the compute dtype (bf16 default — v6e/v7x MXU fast path)."""
    H = params["wq"].shape[0]
    d = H // n_heads
    scale = math.sqrt(d)
    return {
        "wq": (params["wq"] / scale).astype(compute_dtype),
        "bq": (params["bq"] / scale).astype(jnp.float32).reshape(1, H),
        "wk": params["wk"].astype(compute_dtype),
        "bk": params["bk"].astype(jnp.float32).reshape(1, H),
        "wv": params["wv"].astype(compute_dtype),
        "bv": params["bv"].astype(jnp.float32).reshape(1, H),
        "wo": params["wo"].astype(compute_dtype),
        "bo": params["bo"].astype(jnp.float32).reshape(1, H),
    }


def _project_kv(key, value, prepped, compute_dtype, vmem_limit):
    """Project K and V once, outside the per-query-tile attention grid."""
    B, Sk, H = key.shape
    rows = B * Sk
    block_r, rows_pad = _choose_block(rows, (512, 256, 128), 512)

    k2 = key.reshape(rows, H).astype(compute_dtype)
    v2 = value.reshape(rows, H).astype(compute_dtype)
    if rows_pad != rows:
        pad = rows_pad - rows
        k2 = jnp.pad(k2, ((0, pad), (0, 0)))
        v2 = jnp.pad(v2, ((0, pad), (0, 0)))

    x_spec = pl.BlockSpec((block_r, H), lambda r: (r, 0))
    kp, vp = pl.pallas_call(
        _kv_proj_kernel,
        out_shape=(jax.ShapeDtypeStruct((rows_pad, H), compute_dtype),
                   jax.ShapeDtypeStruct((rows_pad, H), compute_dtype)),
        grid_spec=pltpu.PrefetchScalarGridSpec(
            num_scalar_prefetch=0,
            grid=(rows_pad // block_r,),
            in_specs=[x_spec, x_spec,
                      _resident_spec((H, H)), _resident_spec((1, H)),
                      _resident_spec((H, H)), _resident_spec((1, H))],
            out_specs=[x_spec, x_spec],
        ),
        compiler_params=pltpu.CompilerParams(
            dimension_semantics=("parallel",),
            vmem_limit_bytes=vmem_limit),
    )(k2, v2, prepped["wk"], prepped["bk"], prepped["wv"], prepped["bv"])

    kp = kp[:rows].reshape(B, Sk, H)
    vp = vp[:rows].reshape(B, Sk, H)
    return kp, vp


def mha_forward(query, key, value, prepped, n_heads, *,
                block_q=None, block_k=None,
                return_attention=False, attn_dtype=jnp.bfloat16):
    """Pallas multi-head attention forward (eval mode, mask=None).

    Returns (out, attention); attention is None when return_attention=False
    (the fast flash-tiled path). With return_attention=True the result matches
    the PyTorch module's (x, attention) tuple; attention is stored in
    `attn_dtype` (bf16 default) to halve the HBM writeback.
    """
    B, Sq, H = query.shape
    Sk = key.shape[1]
    assert H % n_heads == 0
    d = H // n_heads

    compute_dtype = prepped["wq"].dtype
    vmem_limit = _vmem_limit_bytes()

    # K/V projected once (not per query tile).
    k_proj, v_proj = _project_kv(key, value, prepped, compute_dtype, vmem_limit)

    q = query.astype(compute_dtype)

    # Query-tile selection / padding (pad rather than fall back to huge blocks).
    if block_q is None:
        block_q, Sq_pad = _choose_block(Sq, (512, 256, 128), 512)
    else:
        Sq_pad = ((Sq + block_q - 1) // block_q) * block_q
    if Sq_pad != Sq:
        q = jnp.pad(q, ((0, 0), (0, Sq_pad - Sq), (0, 0)))
    nq = Sq_pad // block_q

    q_spec2 = pl.BlockSpec((1, block_q, H), lambda b, qi: (b, qi, 0))
    out_spec2 = pl.BlockSpec((1, block_q, H), lambda b, qi: (b, qi, 0))

    if return_attention:
        # Full-Sk single-pass kernel (needed to emit the probability tensor).
        kv_spec = pl.BlockSpec((1, Sk, H), lambda b, qi: (b, 0, 0))
        attn_spec = pl.BlockSpec((1, n_heads, block_q, Sk),
                                 lambda b, qi: (b, 0, qi, 0))
        kernel = functools.partial(
            _mha_attn_kernel, n_heads=n_heads, head_dim=d,
            compute_dtype=compute_dtype,
            approx_recip=bool(compute_dtype == jnp.bfloat16))
        out, attn = pl.pallas_call(
            kernel,
            out_shape=(jax.ShapeDtypeStruct((B, Sq_pad, H), query.dtype),
                       jax.ShapeDtypeStruct((B, n_heads, Sq_pad, Sk), attn_dtype)),
            grid_spec=pltpu.PrefetchScalarGridSpec(
                num_scalar_prefetch=0,
                grid=(B, nq),
                in_specs=[q_spec2, kv_spec, kv_spec,
                          _resident_spec((H, H)), _resident_spec((1, H)),
                          _resident_spec((H, H)), _resident_spec((1, H))],
                out_specs=[out_spec2, attn_spec],
                scratch_shapes=[pltpu.VMEM((block_q, H), jnp.float32)],
            ),
            compiler_params=pltpu.CompilerParams(
                dimension_semantics=("parallel", "parallel"),
                vmem_limit_bytes=vmem_limit),
        )(q, k_proj, v_proj, prepped["wq"], prepped["bq"],
          prepped["wo"], prepped["bo"])
        if Sq_pad != Sq:
            out = out[:, :Sq]
            attn = attn[:, :, :Sq]
        return out, attn

    # Default fast path: flash-style Sk tiling (online softmax).
    if block_k is None:
        block_k = _choose_block_k(Sk)
    assert Sk % block_k == 0, "block_k must divide the key sequence length"
    nk = Sk // block_k

    q_spec = pl.BlockSpec((1, block_q, H), lambda b, qi, ki: (b, qi, 0))
    kv_spec = pl.BlockSpec((1, block_k, H), lambda b, qi, ki: (b, ki, 0))
    out_spec = pl.BlockSpec((1, block_q, H), lambda b, qi, ki: (b, qi, 0))

    kernel = functools.partial(
        _flash_mha_kernel, n_heads=n_heads, head_dim=d,
        compute_dtype=compute_dtype)

    out = pl.pallas_call(
        kernel,
        out_shape=jax.ShapeDtypeStruct((B, Sq_pad, H), query.dtype),
        grid_spec=pltpu.PrefetchScalarGridSpec(
            num_scalar_prefetch=0,
            grid=(B, nq, nk),
            in_specs=[q_spec, kv_spec, kv_spec,
                      _resident_spec((H, H)), _resident_spec((1, H)),
                      _resident_spec((H, H)), _resident_spec((1, H))],
            out_specs=out_spec,
            scratch_shapes=[
                pltpu.VMEM((block_q, H), compute_dtype),       # projected Q
                pltpu.VMEM((block_q, n_heads), jnp.float32),   # running max m
                pltpu.VMEM((block_q, n_heads), jnp.float32),   # running denom l
                pltpu.VMEM((block_q, H), jnp.float32),         # running PV acc
            ],
        ),
        compiler_params=pltpu.CompilerParams(
            dimension_semantics=("parallel", "parallel", "arbitrary"),
            vmem_limit_bytes=vmem_limit),
    )(q, k_proj, v_proj, prepped["wq"], prepped["bq"],
      prepped["wo"], prepped["bo"])

    if Sq_pad != Sq:
        out = out[:, :Sq]
    return out, None


# --------------------------------------------------------------------------
# Reference + test
# --------------------------------------------------------------------------

def _reference(query, key, value, params, n_heads):
    B, S, H = query.shape
    d = H // n_heads
    scale = math.sqrt(d)
    with jax.default_matmul_precision("highest"):
        def proj(x, w, b):
            return x @ w + b
        Q = proj(query, params["wq"], params["bq"]).reshape(B, S, n_heads, d).transpose(0, 2, 1, 3)
        K = proj(key, params["wk"], params["bk"]).reshape(B, S, n_heads, d).transpose(0, 2, 1, 3)
        V = proj(value, params["wv"], params["bv"]).reshape(B, S, n_heads, d).transpose(0, 2, 1, 3)
        energy = jnp.einsum("bhqd,bhkd->bhqk", Q, K) / scale
        attn = jax.nn.softmax(energy, axis=-1)
        x = jnp.einsum("bhqk,bhkd->bhqd", attn, V)
        x = x.transpose(0, 2, 1, 3).reshape(B, S, H)
        out = x @ params["wo"] + params["bo"]
    return out, attn


def _make_params(key0, H):
    keys = jax.random.split(key0, 8)
    bound = 1.0 / math.sqrt(H)
    names = ["wq", "bq", "wk", "bk", "wv", "bv", "wo", "bo"]
    params = {}
    for i, name in enumerate(names):
        shape = (H, H) if name.startswith("w") else (H,)
        params[name] = jax.random.uniform(keys[i], shape, jnp.float32, -bound, bound)
    return params


if __name__ == "__main__":
    # --- small shapes consistent with the module -------------------------
    B, S, H, n_heads = 2, 8, 32, 4
    key0 = jax.random.PRNGKey(0)
    kp, kq, kk, kv = jax.random.split(key0, 4)
    params = _make_params(kp, H)
    query = jax.random.normal(kq, (B, S, H), jnp.float32)
    key_in = jax.random.normal(kk, (B, S, H), jnp.float32)
    value = jax.random.normal(kv, (B, S, H), jnp.float32)

    ref_out, ref_attn = _reference(query, key_in, value, params, n_heads)

    # f32 parity path, attention returned in f32 (exact reciprocal).
    prepped_f32 = prepare_params(params, n_heads, jnp.float32)
    out, attn = mha_forward(query, key_in, value, prepped_f32, n_heads,
                            return_attention=True, attn_dtype=jnp.float32)
    out = jax.block_until_ready(out)
    attn = jax.block_until_ready(attn)
    assert out.shape == (B, S, H) and attn.shape == (B, n_heads, S, S)
    assert jnp.allclose(out, ref_out, atol=1e-4, rtol=1e-4)
    assert jnp.allclose(attn, ref_attn, atol=1e-5, rtol=1e-5)

    # Default output-only flash path, f32 compute (approx reciprocal on EUP).
    out_only, attn_none = mha_forward(query, key_in, value, prepped_f32, n_heads)
    out_only = jax.block_until_ready(out_only)
    assert attn_none is None
    assert jnp.allclose(out_only, ref_out, atol=5e-3, rtol=5e-3)

    # Default bf16 compute path (v6e/v7x MXU fast path, f32 acc + f32 softmax).
    prepped_bf16 = prepare_params(params, n_heads)  # bf16 default
    out_bf, _ = mha_forward(query.astype(jnp.bfloat16), key_in.astype(jnp.bfloat16),
                            value.astype(jnp.bfloat16), prepped_bf16, n_heads)
    out_bf = jax.block_until_ready(out_bf)
    assert jnp.allclose(out_bf.astype(jnp.float32), ref_out, atol=5e-2, rtol=5e-2)

    out_bf2, attn_bf = mha_forward(query.astype(jnp.bfloat16), key_in.astype(jnp.bfloat16),
                                   value.astype(jnp.bfloat16), prepped_bf16, n_heads,
                                   return_attention=True)
    out_bf2 = jax.block_until_ready(out_bf2)
    attn_bf = jax.block_until_ready(attn_bf)
    assert attn_bf.dtype == jnp.bfloat16
    assert jnp.allclose(out_bf2.astype(jnp.float32), ref_out, atol=5e-2, rtol=5e-2)
    assert jnp.allclose(attn_bf.astype(jnp.float32), ref_attn, atol=2e-2, rtol=2e-2)

    # Multi-tile flash path (exercises online softmax across several k tiles).
    B2, S2, H2, nh2 = 1, 256, 128, 4
    key1 = jax.random.PRNGKey(1)
    kp2, kq2, kk2, kv2 = jax.random.split(key1, 4)
    params2 = _make_params(kp2, H2)
    q2 = jax.random.normal(kq2, (B2, S2, H2), jnp.float32)
    k2 = jax.random.normal(kk2, (B2, S2, H2), jnp.float32)
    v2 = jax.random.normal(kv2, (B2, S2, H2), jnp.float32)
    ref_out2, _ = _reference(q2, k2, v2, params2, nh2)
    prepped2 = prepare_params(params2, nh2, jnp.float32)
    out2, _ = mha_forward(q2, k2, v2, prepped2, nh2, block_q=128, block_k=64)
    out2 = jax.block_until_ready(out2)
    assert jnp.allclose(out2, ref_out2, atol=5e-3, rtol=5e-3)

    print("KERNEL_OK")
</pallas_src>

<mosaic_0001>
module attributes {stable_mosaic.version = 11 : i64} {
  func.func @_kv_proj_kernel(%arg0: i32, %arg1: memref<16x32xf32, #tpu.memory_space<vmem>>, %arg2: memref<16x32xf32, #tpu.memory_space<vmem>>, %arg3: memref<32x32xf32, #tpu.memory_space<vmem>>, %arg4: memref<1x32xf32, #tpu.memory_space<vmem>>, %arg5: memref<32x32xf32, #tpu.memory_space<vmem>>, %arg6: memref<1x32xf32, #tpu.memory_space<vmem>>, %arg7: memref<16x32xf32, #tpu.memory_space<vmem>>, %arg8: memref<16x32xf32, #tpu.memory_space<vmem>>) attributes {dimension_semantics = [#tpu.dimension_semantics<parallel>], iteration_bounds = array<i64: 1>, scalar_prefetch = 0 : i64, scratch_operands = 0 : i64, tpu.core_type = #tpu.core_type<tc>, window_params = [{transform_indices = @transform_0, window_bounds = array<i64: 16, 32>}, {transform_indices = @transform_1, window_bounds = array<i64: 16, 32>}, {pipeline_mode = #tpu.pipeline_mode<synchronous>, transform_indices = @transform_2, window_bounds = array<i64: 32, 32>}, {pipeline_mode = #tpu.pipeline_mode<synchronous>, transform_indices = @transform_3, window_bounds = array<i64: 1, 32>}, {pipeline_mode = #tpu.pipeline_mode<synchronous>, transform_indices = @transform_4, window_bounds = array<i64: 32, 32>}, {pipeline_mode = #tpu.pipeline_mode<synchronous>, transform_indices = @transform_5, window_bounds = array<i64: 1, 32>}, {transform_indices = @transform_6, window_bounds = array<i64: 16, 32>}, {transform_indices = @transform_7, window_bounds = array<i64: 16, 32>}]} {
    %c0 = arith.constant 0 : index
    %c0_0 = arith.constant 0 : index
    %0 = vector.load %arg1[%c0, %c0_0] : memref<16x32xf32, #tpu.memory_space<vmem>>, vector<16x32xf32>
    %c0_1 = arith.constant 0 : index
    %c0_2 = arith.constant 0 : index
    %1 = vector.load %arg3[%c0_1, %c0_2] : memref<32x32xf32, #tpu.memory_space<vmem>>, vector<32x32xf32>
    %cst = arith.constant dense<0.000000e+00> : vector<16x32xf32>
    %2 = tpu.matmul %0, %1, %cst {dimension_numbers = #tpu.dot_dimension_numbers<[1], [0], [0], [1], [0, 0, 1, 1], [], []>} : vector<16x32xf32>, vector<32x32xf32>, vector<16x32xf32> -> vector<16x32xf32>
    %c0_3 = arith.constant 0 : index
    %c0_4 = arith.constant 0 : index
    %3 = vector.load %arg4[%c0_3, %c0_4] : memref<1x32xf32, #tpu.memory_space<vmem>>, vector<1x32xf32>
    %4 = vector.broadcast %3 : vector<1x32xf32> to vector<16x32xf32>
    %5 = arith.addf %2, %4 : vector<16x32xf32>
    %c0_5 = arith.constant 0 : index
    %c0_6 = arith.constant 0 : index
    %6 = vector.load %arg7[%c0_5, %c0_6] : memref<16x32xf32, #tpu.memory_space<vmem>>, vector<16x32xf32>
    tpu.vector_store %arg7[%c0_5, %c0_6], %5 {strides = array<i32>} : memref<16x32xf32, #tpu.memory_space<vmem>>, vector<16x32xf32>,
    %c0_7 = arith.constant 0 : index
    %c0_8 = arith.constant 0 : index
    %7 = vector.load %arg2[%c0_7, %c0_8] : memref<16x32xf32, #tpu.memory_space<vmem>>, vector<16x32xf32>
    %c0_9 = arith.constant 0 : index
    %c0_10 = arith.constant 0 : index
    %8 = vector.load %arg5[%c0_9, %c0_10] : memref<32x32xf32, #tpu.memory_space<vmem>>, vector<32x32xf32>
    %cst_11 = arith.constant dense<0.000000e+00> : vector<16x32xf32>
    %9 = tpu.matmul %7, %8, %cst_11 {dimension_numbers = #tpu.dot_dimension_numbers<[1], [0], [0], [1], [0, 0, 1, 1], [], []>} : vector<16x32xf32>, vector<32x32xf32>, vector<16x32xf32> -> vector<16x32xf32>
    %c0_12 = arith.constant 0 : index
    %c0_13 = arith.constant 0 : index
    %10 = vector.load %arg6[%c0_12, %c0_13] : memref<1x32xf32, #tpu.memory_space<vmem>>, vector<1x32xf32>
    %11 = vector.broadcast %10 : vector<1x32xf32> to vector<16x32xf32>
    %12 = arith.addf %9, %11 : vector<16x32xf32>
    %c0_14 = arith.constant 0 : index
    %c0_15 = arith.constant 0 : index
    %13 = vector.load %arg8[%c0_14, %c0_15] : memref<16x32xf32, #tpu.memory_space<vmem>>, vector<16x32xf32>
    tpu.vector_store %arg8[%c0_14, %c0_15], %12 {strides = array<i32>} : memref<16x32xf32, #tpu.memory_space<vmem>>, vector<16x32xf32>,
    return
  }
  func.func @transform_0(%arg0: i32) -> (i32, i32) {
    %c0_i32 = arith.constant 0 : i32
    %c0_i32_0 = arith.constant 0 : i32
    return %arg0, %c0_i32 : i32, i32
  }
  func.func @transform_1(%arg0: i32) -> (i32, i32) {
    %c0_i32 = arith.constant 0 : i32
    %c0_i32_0 = arith.constant 0 : i32
    return %arg0, %c0_i32 : i32, i32
  }
  func.func @transform_2(%arg0: i32) -> (i32, i32) {
    %c0_i32 = arith.constant 0 : i32
    %c0_i32_0 = arith.constant 0 : i32
    %c0_i32_1 = arith.constant 0 : i32
    return %c0_i32, %c0_i32_0 : i32, i32
  }
  func.func @transform_3(%arg0: i32) -> (i32, i32) {
    %c0_i32 = arith.constant 0 : i32
    %c0_i32_0 = arith.constant 0 : i32
    %c0_i32_1 = arith.constant 0 : i32
    return %c0_i32, %c0_i32_0 : i32, i32
  }
  func.func @transform_4(%arg0: i32) -> (i32, i32) {
    %c0_i32 = arith.constant 0 : i32
    %c0_i32_0 = arith.constant 0 : i32
    %c0_i32_1 = arith.constant 0 : i32
    return %c0_i32, %c0_i32_0 : i32, i32
  }
  func.func @transform_5(%arg0: i32) -> (i32, i32) {
    %c0_i32 = arith.constant 0 : i32
    %c0_i32_0 = arith.constant 0 : i32
    %c0_i32_1 = arith.constant 0 : i32
    return %c0_i32, %c0_i32_0 : i32, i32
  }
  func.func @transform_6(%arg0: i32) -> (i32, i32) {
    %c0_i32 = arith.constant 0 : i32
    %c0_i32_0 = arith.constant 0 : i32
    return %arg0, %c0_i32 : i32, i32
  }
  func.func @transform_7(%arg0: i32) -> (i32, i32) {
    %c0_i32 = arith.constant 0 : i32
    %c0_i32_0 = arith.constant 0 : i32
    return %arg0, %c0_i32 : i32, i32
  }
}

</mosaic_0001>

<llo_original>
// kernel: tpu_custom_call.1
$region0: #{tpu_custom_call.1}
  #allocation0 [shape = 'u32[]', space=smem, size = 0x4, offset = 0x4, fixed_abs, tag = 'smem constant byte address 0x4 - core index']
  #allocation1 [shape = 'u32[144,128]{1,0:T(1,128)}', space=vmem, size = 0x12000, scoped, tag = 'internal scratch']
  %s0 = inlined_call_operand.hbm [shape: f32[16,32], index: 0, kind: input, shape index: {}]
  %s1 = inlined_call_operand.hbm [shape: f32[16,32], index: 1, kind: input, shape index: {}]
  %s2 = inlined_call_operand.hbm [shape: f32[32,32], index: 2, kind: input, shape index: {}]
  %s3 = inlined_call_operand.vmem [shape: f32[1,32], index: 3, kind: input, shape index: {}]
  %s4 = inlined_call_operand.hbm [shape: f32[32,32], index: 4, kind: input, shape index: {}]
  %s5 = inlined_call_operand.vmem [shape: f32[1,32], index: 5, kind: input, shape index: {}]
  %s6 = inlined_call_operand.hbm [shape: f32[16,32], index: 6, kind: output, shape index: {0}]
  %s7 = inlined_call_operand.hbm [shape: f32[16,32], index: 7, kind: output, shape index: {1}]
  %8 = xla_tuple %s6, %s7
  %s9 = sld [smem:[#allocation0]]
  $region58: #{tpu_custom_call.1} parent=0
    _
  %s11 = ssub.s32 1, %s9
  %s12 = scalar_select 0, %s11, %s9
  $region1: #{tpu_custom_call.1} parent=0
    #allocation2 [shape = 'u8[8192]{0}', space=vmem, size = 0x2000, scoped, tag = 'input window, operand 0, single buffered']
    #allocation3 [shape = 's32[1]{0}', space=sflag, size = 0x4, scoped, tag = 'scoped memory for tpu_custom_call.1']
    #allocation4 [shape = 's32[1]{0}', space=sflag, size = 0x4, scoped, tag = 'scoped memory for tpu_custom_call.1']
    #allocation5 [shape = 'u8[8192]{0}', space=vmem, size = 0x2000, scoped, tag = 'input window, operand 1, single buffered']
    #allocation6 [shape = 's32[1]{0}', space=sflag, size = 0x4, scoped, tag = 'scoped memory for tpu_custom_call.1']
    #allocation7 [shape = 'u8[16384]{0}', space=vmem, size = 0x4000, scoped, tag = 'input window, operand 2, single buffered']
    #allocation8 [shape = 'u8[16384]{0}', space=vmem, size = 0x4000, scoped, tag = 'input window, operand 4, single buffered']
    #allocation9 [shape = 's32[1]{0}', space=sflag, size = 0x4, scoped, tag = 'scoped memory for tpu_custom_call.1']
    #allocation10 [shape = 'u8[8192]{0}', space=vmem, size = 0x2000, scoped, tag = 'output window, operand 0, single buffered']
    #allocation11 [shape = 'u8[8192]{0}', space=vmem, size = 0x2000, scoped, tag = 'output window, operand 1, single buffered']
    #allocation12 [shape = 's32[1]{0}', space=sflag, size = 0x4, scoped, tag = 'scoped memory for tpu_custom_call.1']
    %13 = vsyncpa [#allocation3], 0
    %14 = vsyncpa [#allocation6], 0
    %15 = vsyncpa [#allocation9], 0
    %16 = vsyncpa [#allocation4], 0
    %17 = vsyncpa [#allocation12], 0
    // Predicated region
    $region2: #{tpu_custom_call.1} parent=1 // pred_check
      _
    $region3: #{tpu_custom_call.1} parent=1 // pred_check_branch
      %19 = sbr.rel (0) target = $region5
    $region4: #{tpu_custom_call.1} parent=1 // pred_region
      %s21 = ssub.s32 256, 256
      %22 = vsyncadd [#allocation3], %s21
      %s23 = sshll.u32 [#allocation2], 4
      %s24 = int_to_ptr.vmem [resolvable:$true] %s23
      %29 = dma.hbm_to_vmem [thread:$0]  %s0, 256, %s24, [#allocation3], 128, 128, 8
    $region5: #{tpu_custom_call.1} parent=1 // pred_fallthru
      _
    // Predicated region
    $region6: #{tpu_custom_call.1} parent=1 // pred_check
      _
    $region7: #{tpu_custom_call.1} parent=1 // pred_check_branch
      %31 = sbr.rel (0) target = $region9
    $region8: #{tpu_custom_call.1} parent=1 // pred_region
      %s33 = ssub.s32 256, 256
      %34 = vsyncadd [#allocation6], %s33
      %s35 = sshll.u32 [#allocation5], 4
      %s36 = int_to_ptr.vmem [resolvable:$true] %s35
      %41 = dma.hbm_to_vmem [thread:$0]  %s1, 256, %s36, [#allocation6], 128, 128, 8
    $region9: #{tpu_custom_call.1} parent=1 // pred_fallthru
      _
    // Predicated region
    $region10: #{tpu_custom_call.1} parent=1 // pred_check
      _
    $region11: #{tpu_custom_call.1} parent=1 // pred_check_branch
      %43 = sbr.rel (0) target = $region13
    $region12: #{tpu_custom_call.1} parent=1 // pred_region
      %s45 = ssub.s32 512, 512
      %46 = vsyncadd [#allocation6], %s45
      %s47 = sshll.u32 [#allocation7], 4
      %s48 = int_to_ptr.vmem [resolvable:$true] %s47
      %53 = dma.hbm_to_vmem [thread:$0]  %s2, 512, %s48, [#allocation6], 128, 128, 8
    $region13: #{tpu_custom_call.1} parent=1 // pred_fallthru
      _
    // Predicated region
    $region14: #{tpu_custom_call.1} parent=1 // pred_check
      _
    $region15: #{tpu_custom_call.1} parent=1 // pred_check_branch
      %55 = sbr.rel (0) target = $region17
    $region16: #{tpu_custom_call.1} parent=1 // pred_region
      _
    $region17: #{tpu_custom_call.1} parent=1 // pred_fallthru
      _
    // Predicated region
    $region18: #{tpu_custom_call.1} parent=1 // pred_check
      _
    $region19: #{tpu_custom_call.1} parent=1 // pred_check_branch
      %57 = sbr.rel (0) target = $region21
    $region20: #{tpu_custom_call.1} parent=1 // pred_region
      %s59 = ssub.s32 512, 512
      %60 = vsyncadd [#allocation9], %s59
      %s61 = sshll.u32 [#allocation8], 4
      %s62 = int_to_ptr.vmem [resolvable:$true] %s61
      %67 = dma.hbm_to_vmem [thread:$0]  %s4, 512, %s62, [#allocation9], 128, 128, 8
    $region21: #{tpu_custom_call.1} parent=1 // pred_fallthru
      _
    // Predicated region
    $region22: #{tpu_custom_call.1} parent=1 // pred_check
      _
    $region23: #{tpu_custom_call.1} parent=1 // pred_check_branch
      %69 = sbr.rel (0) target = $region25
    $region24: #{tpu_custom_call.1} parent=1 // pred_region
      _
    $region25: #{tpu_custom_call.1} parent=1 // pred_fallthru
      _
    // Predicated region
    $region26: #{tpu_custom_call.1} parent=1 // pred_check
      _
    $region27: #{tpu_custom_call.1} parent=1 // pred_check_branch
      %71 = sbr.rel (0) target = $region29
    $region28: #{tpu_custom_call.1} parent=1 // pred_region
      %72 = dma.done [#allocation3], 256
    $region29: #{tpu_custom_call.1} parent=1 // pred_fallthru
      _
    // Predicated region
    $region30: #{tpu_custom_call.1} parent=1 // pred_check
      _
    $region31: #{tpu_custom_call.1} parent=1 // pred_check_branch
      %74 = sbr.rel (0) target = $region33
    $region32: #{tpu_custom_call.1} parent=1 // pred_region
      %75 = dma.done [#allocation6], 256
    $region33: #{tpu_custom_call.1} parent=1 // pred_fallthru
      _
    // Predicated region
    $region34: #{tpu_custom_call.1} parent=1 // pred_check
      _
    $region35: #{tpu_custom_call.1} parent=1 // pred_check_branch
      %77 = sbr.rel (0) target = $region37
    $region36: #{tpu_custom_call.1} parent=1 // pred_region
      %78 = dma.done [#allocation6], 512
    $region37: #{tpu_custom_call.1} parent=1 // pred_fallthru
      _
    // Predicated region
    $region38: #{tpu_custom_call.1} parent=1 // pred_check
      _
    $region39: #{tpu_custom_call.1} parent=1 // pred_check_branch
      %80 = sbr.rel (0) target = $region41
    $region40: #{tpu_custom_call.1} parent=1 // pred_region
      %81 = dma.done [#allocation9], 512
    $region41: #{tpu_custom_call.1} parent=1 // pred_fallthru
      _
    %v82 = vld [vmem:[#allocation2] sm:$0xff]
    %v83 = vld [vmem:[#allocation2 + $0x8] sm:$0xff]
    %v84 = vld [vmem:[#allocation7] sm:$0xff]
    %v85 = vld [vmem:[#allocation7 + $0x8] sm:$0xff]
    %v86 = vld [vmem:[#allocation7 + $0x10] sm:$0xff]
    %v87 = vld [vmem:[#allocation7 + $0x18] sm:$0xff]
    %v88 = vld [vmem:[%s3] sm:$0x1]
    %v90 = vlaneseq
    %v91 = vshrl.u32 %v90, 7
    %v92 = vsub.s32 0, %v91
    %v93 = vrot.slane %v88, %v92
    %vm95 = vcmask 261120
    %v97 = vsel %vm95, %v82, 0
    %v100 = vsel %vm95, %v83, 0
    %102 = vmatprep.subr.mxu0 0.0
    %103 = vmatpush1.msra.mxu0 0.0
    %104 = vmatprep.subr.mxu0 0.0
    %105 = vmatpush1.msra.mxu0 0.0
    %106 = vmatprep.subr.mxu0 0.0
    %107 = vmatpush1.msra.mxu0 0.0
    %108 = vmatprep.subr.mxu0 0.0
    %109 = vmatpush1.msra.mxu0 0.0
    %110 = vmatprep.subr.mxu0 0.0
    %111 = vmatpush1.msra.mxu0 0.0
    %112 = vmatprep.subr.mxu0 0.0
    %113 = vmatpush1.msra.mxu0 0.0
    %114 = vmatprep.subr.mxu0 0.0
    %115 = vmatpush1.msra.mxu0 0.0
    %116 = vmatprep.subr.mxu0 0.0
    %117 = vmatpush1.msra.mxu0 0.0
    %118 = vmatprep.subr.mxu0 0.0
    %119 = vmatpush1.msra.mxu0 0.0
    %120 = vmatprep.subr.mxu0 0.0
    %121 = vmatpush1.msra.mxu0 0.0
    %122 = vmatprep.subr.mxu0 0.0
    %123 = vmatpush1.msra.mxu0 0.0
    %124 = vmatprep.subr.mxu0 0.0
    %125 = vmatpush1.msra.mxu0 0.0
    %126 = vmatprep.subr.mxu0 0.0
    %127 = vmatpush1.msra.mxu0 %v87
    %128 = vmatprep.subr.mxu0 0.0
    %129 = vmatpush1.msra.mxu0 %v86
    %130 = vmatprep.subr.mxu0 0.0
    %131 = vmatpush1.msra.mxu0 %v85
    %132 = vmatprep.subr.mxu0 0.0
    %133 = vmatpush1.msra.mxu0 %v84
    %134 = vmatprep.subr.mxu0 0.0
    %135 = vmatpush2.msra.mxu0 0.0
    %136 = vmatprep.subr.mxu0 0.0
    %137 = vmatpush2.msra.mxu0 0.0
    %138 = vmatprep.subr.mxu0 0.0
    %139 = vmatpush2.msra.mxu0 0.0
    %140 = vmatprep.subr.mxu0 0.0
    %141 = vmatpush2.msra.mxu0 0.0
    %142 = vmatprep.subr.mxu0 0.0
    %143 = vmatpush2.msra.mxu0 0.0
    %144 = vmatprep.subr.mxu0 0.0
    %145 = vmatpush2.msra.mxu0 0.0
    %146 = vmatprep.subr.mxu0 0.0
    %147 = vmatpush2.msra.mxu0 0.0
    %148 = vmatprep.subr.mxu0 0.0
    %149 = vmatpush2.msra.mxu0 0.0
    %150 = vmatprep.subr.mxu0 0.0
    %151 = vmatpush2.msra.mxu0 0.0
    %152 = vmatprep.subr.mxu0 0.0
    %153 = vmatpush2.msra.mxu0 0.0
    %154 = vmatprep.subr.mxu0 0.0
    %155 = vmatpush2.msra.mxu0 0.0
    %156 = vmatprep.subr.mxu0 0.0
    %157 = vmatpush2.msra.mxu0 0.0
    %158 = vmatprep.subr.mxu0 0.0
    %159 = vmatpush2.msra.mxu0 0.0
    %160 = vmatprep.subr.mxu0 0.0
    %161 = vmatpush2.msra.mxu0 0.0
    %162 = vmatprep.subr.mxu0 0.0
    %163 = vmatpush2.msra.mxu0 0.0
    %164 = vmatprep.subr.mxu0 0.0
    %165 = vmatpush2.msra.mxu0 0.0
    %166 = vmatprep.mubr.f32.mxu0 0.0
    %167 = vmatmul.mubr.f32.gmra.mxu0 %v97
    %v168 = vpop.f32.mrf.mxu0
    %v169 = vadd.f32 %v93, %v168
    %v170 = vpop.f32.mrf.mxu0
    %171 = vmatprep.mubr.f32.mxu0 0.0
    %172 = vmatmul.mubr.f32.gmra.mxu0 %v100
    %v173 = vpop.f32.mrf.mxu0
    %v174 = vadd.f32 %v93, %v173
    %v175 = vpop.f32.mrf.mxu0
    %176 = vdwg.mxu0
    %177 = vst.msk [vmem:[#allocation10] sm:$0xff] %vm95, %v169
    %178 = vst.msk [vmem:[#allocation10 + $0x8] sm:$0xff] %vm95, %v174
    %v179 = vld [vmem:[#allocation5] sm:$0xff]
    %v180 = vld [vmem:[#allocation5 + $0x8] sm:$0xff]
    %v181 = vld [vmem:[#allocation8] sm:$0xff]
    %v182 = vld [vmem:[#allocation8 + $0x8] sm:$0xff]
    %v183 = vld [vmem:[#allocation8 + $0x10] sm:$0xff]
    %v184 = vld [vmem:[#allocation8 + $0x18] sm:$0xff]
    %v185 = vld [vmem:[%s5] sm:$0x1]
    %v187 = vlaneseq
    %v188 = vshrl.u32 %v187, 7
    %v189 = vsub.s32 0, %v188
    %v190 = vrot.slane %v185, %v189
    %v193 = vsel %vm95, %v179, 0
    %v196 = vsel %vm95, %v180, 0
    %198 = vmatprep.subr.mxu0 0.0
    %199 = vmatpush1.msra.mxu0 0.0
    %200 = vmatprep.subr.mxu0 0.0
    %201 = vmatpush1.msra.mxu0 0.0
    %202 = vmatprep.subr.mxu0 0.0
    %203 = vmatpush1.msra.mxu0 0.0
    %204 = vmatprep.subr.mxu0 0.0
    %205 = vmatpush1.msra.mxu0 0.0
    %206 = vmatprep.subr.mxu0 0.0
    %207 = vmatpush1.msra.mxu0 0.0
    %208 = vmatprep.subr.mxu0 0.0
    %209 = vmatpush1.msra.mxu0 0.0
    %210 = vmatprep.subr.mxu0 0.0
    %211 = vmatpush1.msra.mxu0 0.0
    %212 = vmatprep.subr.mxu0 0.0
    %213 = vmatpush1.msra.mxu0 0.0
    %214 = vmatprep.subr.mxu0 0.0
    %215 = vmatpush1.msra.mxu0 0.0
    %216 = vmatprep.subr.mxu0 0.0
    %217 = vmatpush1.msra.mxu0 0.0
    %218 = vmatprep.subr.mxu0 0.0
    %219 = vmatpush1.msra.mxu0 0.0
    %220 = vmatprep.subr.mxu0 0.0
    %221 = vmatpush1.msra.mxu0 0.0
    %222 = vmatprep.subr.mxu0 0.0
    %223 = vmatpush1.msra.mxu0 %v184
    %224 = vmatprep.subr.mxu0 0.0
    %225 = vmatpush1.msra.mxu0 %v183
    %226 = vmatprep.subr.mxu0 0.0
    %227 = vmatpush1.msra.mxu0 %v182
    %228 = vmatprep.subr.mxu0 0.0
    %229 = vmatpush1.msra.mxu0 %v181
    %230 = vmatprep.subr.mxu0 0.0
    %231 = vmatpush2.msra.mxu0 0.0
    %232 = vmatprep.subr.mxu0 0.0
    %233 = vmatpush2.msra.mxu0 0.0
    %234 = vmatprep.subr.mxu0 0.0
    %235 = vmatpush2.msra.mxu0 0.0
    %236 = vmatprep.subr.mxu0 0.0
    %237 = vmatpush2.msra.mxu0 0.0
    %238 = vmatprep.subr.mxu0 0.0
    %239 = vmatpush2.msra.mxu0 0.0
    %240 = vmatprep.subr.mxu0 0.0
    %241 = vmatpush2.msra.mxu0 0.0
    %242 = vmatprep.subr.mxu0 0.0
    %243 = vmatpush2.msra.mxu0 0.0
    %244 = vmatprep.subr.mxu0 0.0
    %245 = vmatpush2.msra.mxu0 0.0
    %246 = vmatprep.subr.mxu0 0.0
    %247 = vmatpush2.msra.mxu0 0.0
    %248 = vmatprep.subr.mxu0 0.0
    %249 = vmatpush2.msra.mxu0 0.0
    %250 = vmatprep.subr.mxu0 0.0
    %251 = vmatpush2.msra.mxu0 0.0
    %252 = vmatprep.subr.mxu0 0.0
    %253 = vmatpush2.msra.mxu0 0.0
    %254 = vmatprep.subr.mxu0 0.0
    %255 = vmatpush2.msra.mxu0 0.0
    %256 = vmatprep.subr.mxu0 0.0
    %257 = vmatpush2.msra.mxu0 0.0
    %258 = vmatprep.subr.mxu0 0.0
    %259 = vmatpush2.msra.mxu0 0.0
    %260 = vmatprep.subr.mxu0 0.0
    %261 = vmatpush2.msra.mxu0 0.0
    %262 = vmatprep.mubr.f32.mxu0 0.0
    %263 = vmatmul.mubr.f32.gmra.mxu0 %v193
    %v264 = vpop.f32.mrf.mxu0
    %v265 = vadd.f32 %v190, %v264
    %v266 = vpop.f32.mrf.mxu0
    %267 = vmatprep.mubr.f32.mxu0 0.0
    %268 = vmatmul.mubr.f32.gmra.mxu0 %v196
    %v269 = vpop.f32.mrf.mxu0
    %v270 = vadd.f32 %v190, %v269
    %v271 = vpop.f32.mrf.mxu0
    %272 = vdwg.mxu0
    %273 = vst.msk [vmem:[#allocation11] sm:$0xff] %vm95, %v265
    %274 = vst.msk [vmem:[#allocation11 + $0x8] sm:$0xff] %vm95, %v270
    // Predicated region
    $region42: #{tpu_custom_call.1} parent=1 // pred_check
      _
    $region43: #{tpu_custom_call.1} parent=1 // pred_check_branch
      %276 = sbr.rel (0) target = $region45
    $region44: #{tpu_custom_call.1} parent=1 // pred_region
      %s278 = ssub.s32 256, 256
      %279 = vsyncadd [#allocation4], %s278
      %s280 = sshll.u32 [#allocation10], 4
      %s281 = int_to_ptr.vmem [resolvable:$true] %s280
      %286 = dma.vmem_to_hbm [thread:$0]  %s281, 256, %s6, [#allocation4], 128, 128, 8
    $region45: #{tpu_custom_call.1} parent=1 // pred_fallthru
      _
    // Predicated region
    $region46: #{tpu_custom_call.1} parent=1 // pred_check
      _
    $region47: #{tpu_custom_call.1} parent=1 // pred_check_branch
      %288 = sbr.rel (0) target = $region49
    $region48: #{tpu_custom_call.1} parent=1 // pred_region
      %s290 = ssub.s32 256, 256
      %291 = vsyncadd [#allocation12], %s290
      %s292 = sshll.u32 [#allocation11], 4
      %s293 = int_to_ptr.vmem [resolvable:$true] %s292
      %298 = dma.vmem_to_hbm [thread:$0]  %s293, 256, %s7, [#allocation12], 128, 128, 8
    $region49: #{tpu_custom_call.1} parent=1 // pred_fallthru
      _
    // Predicated region
    $region50: #{tpu_custom_call.1} parent=1 // pred_check
      _
    $region51: #{tpu_custom_call.1} parent=1 // pred_check_branch
      %300 = sbr.rel (0) target = $region53
    $region52: #{tpu_custom_call.1} parent=1 // pred_region
      %301 = dma.done [#allocation4], 256
    $region53: #{tpu_custom_call.1} parent=1 // pred_fallthru
      _
    // Predicated region
    $region54: #{tpu_custom_call.1} parent=1 // pred_check
      _
    $region55: #{tpu_custom_call.1} parent=1 // pred_check_branch
      %303 = sbr.rel (0) target = $region57
    $region56: #{tpu_custom_call.1} parent=1 // pred_region
      %304 = dma.done [#allocation12], 256
    $region57: #{tpu_custom_call.1} parent=1 // pred_fallthru
      _
    %305 = vsyncpa [#allocation3], 1
    %306 = vsyncpa [#allocation6], 1
    %307 = vsyncpa [#allocation9], 1
    %308 = vsyncpa [#allocation4], 1
    %309 = vsyncpa [#allocation12], 1

</llo_original>
